<compile_context>
chip_gen: v7x
topology: tpu7x:2x2x1
jax: 0.10.0
libtpu: 0.0.40
codegen_flags: <defaults>
</compile_context>

<pallas_src>
import jax
import jax.numpy as jnp
from jax.experimental import pallas as pl
from jax.experimental.pallas import tpu as pltpu


# ----------------------------- kernel factory --------------------------------

def _make_kernel(ts, d, pos_streamed, pos_1d, use_tt):
    """Build the embedding kernel for a given static configuration."""

    def kernel(*refs):
        i = 0
        ids_ref = refs[i]; i += 1                       # SMEM (B, S_pad) int32
        pids_ref = None
        tids_ref = None
        if not pos_streamed:
            pids_ref = refs[i]; i += 1                  # SMEM (S_pad,) or (B, S_pad)
        if use_tt:
            tids_ref = refs[i]; i += 1                  # SMEM (B, S_pad)
        word_hbm = refs[i]; i += 1                      # ANY/HBM (V, D)
        if pos_streamed:
            pos_blk = refs[i]; i += 1                   # VMEM (ts, d) contiguous rows
            pos_hbm = None
        else:
            pos_hbm = refs[i]; i += 1                   # ANY/HBM (P, D)
            pos_blk = None
        tt_hbm = None
        if use_tt:
            tt_hbm = refs[i]; i += 1                    # ANY/HBM (T, D)
        out_ref = refs[i]; i += 1                       # VMEM (1, ts, d)
        wbuf = refs[i]; i += 1                          # VMEM (ts, d) word rows
        sem = refs[i]; i += 1                           # DMA sem (1,)
        pbuf = None
        tbuf = None
        if not pos_streamed:
            pbuf = refs[i]; i += 1                      # VMEM (ts, d) pos rows
        if use_tt:
            tbuf = refs[i]; i += 1                      # VMEM (ts, d) tokentype rows

        c = pl.program_id(0)                            # sequence-chunk index
        b = pl.program_id(1)                            # batch index
        base = c * ts

        # Issue every row-gather DMA for this chunk up front: many small
        # outstanding copies on one semaphore hide HBM gather latency.
        @pl.loop(0, ts)
        def _issue(t):
            s = base + t
            wid = ids_ref[b, s]
            pltpu.make_async_copy(word_hbm.at[pl.ds(wid, 1)],
                                  wbuf.at[pl.ds(t, 1)], sem.at[0]).start()
            if not pos_streamed:
                pid = pids_ref[s] if pos_1d else pids_ref[b, s]
                pltpu.make_async_copy(pos_hbm.at[pl.ds(pid, 1)],
                                      pbuf.at[pl.ds(t, 1)], sem.at[0]).start()
            if use_tt:
                tid = tids_ref[b, s]
                pltpu.make_async_copy(tt_hbm.at[pl.ds(tid, 1)],
                                      tbuf.at[pl.ds(t, 1)], sem.at[0]).start()

        # Drain the semaphore: all copies are identical (1, D) transfers, so
        # matching dummy descriptors can wait for them in any order.  No data
        # is read until ALL waits have completed.
        @pl.loop(0, ts)
        def _drain(t):
            pltpu.make_async_copy(word_hbm.at[pl.ds(0, 1)],
                                  wbuf.at[pl.ds(t, 1)], sem.at[0]).wait()
            if not pos_streamed:
                pltpu.make_async_copy(pos_hbm.at[pl.ds(0, 1)],
                                      pbuf.at[pl.ds(t, 1)], sem.at[0]).wait()
            if use_tt:
                pltpu.make_async_copy(tt_hbm.at[pl.ds(0, 1)],
                                      tbuf.at[pl.ds(t, 1)], sem.at[0]).wait()

        # One dense fused add over the whole (ts, d) slab; accumulate in f32
        # and cast once on the lane+sublane-dense store.
        acc = wbuf[...].astype(jnp.float32)
        if pos_streamed:
            acc = acc + pos_blk[...].astype(jnp.float32)
        else:
            acc = acc + pbuf[...].astype(jnp.float32)
        if use_tt:
            acc = acc + tbuf[...].astype(jnp.float32)
        out_ref[0] = acc.astype(out_ref.dtype)

    return kernel


# ----------------------------- wrapper ---------------------------------------

def gpt_embedding_1d(input_ids, word_emb, pos_emb,
                     position_ids=None, tokentype_emb=None, tokentype_ids=None):
    """x = word_emb[input_ids] + pos_emb[position_ids] (+ tokentype_emb[tokentype_ids])."""
    B, S = input_ids.shape
    V, D = word_emb.shape
    dtype = word_emb.dtype
    itemsize = jnp.dtype(dtype).itemsize

    pos_emb = pos_emb.astype(dtype)
    use_tt = (tokentype_emb is not None) and (tokentype_ids is not None)
    if use_tt:
        tokentype_emb = tokentype_emb.astype(dtype)

    # ---- choose the sequence tile (lane+sublane dense, VMEM-budgeted) -------
    target_bytes = 2 * 1024 * 1024                       # ~2 MiB per gather buffer
    ts = max(8, min(512, target_bytes // max(1, D * itemsize)))
    ts = int(ts) - int(ts) % 8
    ts = max(8, ts)
    s_ceil8 = ((S + 7) // 8) * 8
    ts = min(ts, s_ceil8)
    n_chunks = -(-S // ts)
    s_pad = n_chunks * ts

    def pad_ids(a):
        a = a.astype(jnp.int32)
        if a.shape[-1] != s_pad:
            pad = [(0, 0)] * (a.ndim - 1) + [(0, s_pad - a.shape[-1])]
            a = jnp.pad(a, pad)                          # pad with id 0 (valid row)
        return a

    scalars = [pad_ids(input_ids)]

    pos_streamed = position_ids is None
    pos_1d = False
    if pos_streamed:
        # Sequential positions: stream contiguous (ts, D) blocks, no gather.
        if pos_emb.shape[0] < s_pad:
            pos_emb = jnp.pad(pos_emb, ((0, s_pad - pos_emb.shape[0]), (0, 0)))
        pos_table = pos_emb
    else:
        position_ids = jnp.asarray(position_ids)
        if position_ids.ndim == 1 or (position_ids.ndim == 2 and position_ids.shape[0] == 1):
            pos_1d = True
            scalars.append(pad_ids(position_ids.reshape(-1)))
        else:
            scalars.append(pad_ids(jnp.broadcast_to(position_ids, (B, S))))
        pos_table = pos_emb
    if use_tt:
        scalars.append(pad_ids(jnp.broadcast_to(jnp.asarray(tokentype_ids), (B, S))))

    # ---- specs ---------------------------------------------------------------
    in_specs = [pl.BlockSpec(memory_space=pl.ANY)]        # word table stays in HBM
    operands = [word_emb]
    if pos_streamed:
        in_specs.append(pl.BlockSpec((ts, D), lambda c, b, *_: (c, 0)))
    else:
        in_specs.append(pl.BlockSpec(memory_space=pl.ANY))
    operands.append(pos_table)
    if use_tt:
        in_specs.append(pl.BlockSpec(memory_space=pl.ANY))
        operands.append(tokentype_emb)

    out_specs = pl.BlockSpec((1, ts, D), lambda c, b, *_: (b, c, 0))

    scratch = [pltpu.VMEM((ts, D), dtype), pltpu.SemaphoreType.DMA((1,))]
    if not pos_streamed:
        scratch.append(pltpu.VMEM((ts, D), dtype))
    if use_tt:
        scratch.append(pltpu.VMEM((ts, D), dtype))

    # ---- cost / vmem hints ---------------------------------------------------
    n_gathered = 1 + (0 if pos_streamed else 1) + (1 if use_tt else 0)
    read_bytes = B * s_pad * D * itemsize * n_gathered
    if pos_streamed:
        read_bytes += s_pad * D * itemsize
    write_bytes = B * s_pad * D * itemsize
    flops = B * s_pad * D * (1 + (1 if use_tt else 0))
    buf_bytes = ts * D * itemsize
    vmem_limit = int(min(100 * 1024 * 1024,
                         max(32 * 1024 * 1024, 8 * buf_bytes + (4 << 20))))

    kernel = _make_kernel(ts, D, pos_streamed, pos_1d, use_tt)

    out = pl.pallas_call(
        kernel,
        out_shape=jax.ShapeDtypeStruct((B, s_pad, D), dtype),
        grid_spec=pltpu.PrefetchScalarGridSpec(
            num_scalar_prefetch=len(scalars),
            grid=(n_chunks, B),
            in_specs=in_specs,
            out_specs=out_specs,
            scratch_shapes=scratch,
        ),
        compiler_params=pltpu.CompilerParams(
            dimension_semantics=("parallel", "parallel"),
            vmem_limit_bytes=vmem_limit,
        ),
        cost_estimate=pl.CostEstimate(
            flops=int(flops), transcendentals=0,
            bytes_accessed=int(read_bytes + write_bytes)),
    )(*scalars, *operands)

    if s_pad != S:
        out = out[:, :S, :]
    return out


# ----------------------------- test ------------------------------------------

if __name__ == "__main__":
    # Small but lane-dense shapes (D multiple of 128 -> unmasked stores).
    B, S, D = 2, 8, 128
    vocab_size = 512
    max_position_embeddings = 64
    num_tokentypes = 4
    padding_idx = 0

    key = jax.random.PRNGKey(0)
    k_w, k_p, k_t, k_ids, k_tt, k_pid = jax.random.split(key, 6)

    word_emb = 0.02 * jax.random.normal(k_w, (vocab_size, D), jnp.float32)
    # PyTorch nn.Embedding(padding_idx=0) zeroes that row at init; forward is
    # still a plain lookup, so this only affects the weights, not the kernel.
    word_emb = word_emb.at[padding_idx].set(0.0)
    pos_emb = 0.02 * jax.random.normal(k_p, (max_position_embeddings, D), jnp.float32)
    tt_emb = 0.02 * jax.random.normal(k_t, (num_tokentypes, D), jnp.float32)

    input_ids = jax.random.randint(k_ids, (B, S), 0, vocab_size, dtype=jnp.int32)
    tokentype_ids = jax.random.randint(k_tt, (B, S), 0, num_tokentypes, dtype=jnp.int32)

    # --- default path: word + position (position_ids=None -> arange) ---
    out = gpt_embedding_1d(input_ids, word_emb, pos_emb)
    out = jax.block_until_ready(out)
    pos_ids_ref = jnp.arange(S, dtype=jnp.int32)[None, :]
    ref = word_emb[input_ids] + pos_emb[jnp.broadcast_to(pos_ids_ref, (B, S))]
    assert out.shape == (B, S, D)
    assert jnp.allclose(out, ref, atol=1e-6, rtol=1e-6), float(jnp.max(jnp.abs(out - ref)))

    # --- tokentype path (num_tokentypes > 0 and tokentype_ids given) ---
    out_tt = gpt_embedding_1d(input_ids, word_emb, pos_emb,
                              tokentype_emb=tt_emb, tokentype_ids=tokentype_ids)
    out_tt = jax.block_until_ready(out_tt)
    ref_tt = ref + tt_emb[tokentype_ids]
    assert jnp.allclose(out_tt, ref_tt, atol=1e-6, rtol=1e-6), (
        float(jnp.max(jnp.abs(out_tt - ref_tt))))

    # --- explicit position_ids path (general row-gather for positions) ---
    pos_ids = jax.random.randint(k_pid, (B, S), 0, max_position_embeddings, dtype=jnp.int32)
    out_g = gpt_embedding_1d(input_ids, word_emb, pos_emb, position_ids=pos_ids)
    out_g = jax.block_until_ready(out_g)
    ref_g = word_emb[input_ids] + pos_emb[pos_ids]
    assert jnp.allclose(out_g, ref_g, atol=1e-6, rtol=1e-6), (
        float(jnp.max(jnp.abs(out_g - ref_g))))

    print("KERNEL_OK")
</pallas_src>

<mosaic_0001>
module attributes {stable_mosaic.version = 11 : i64} {
  func.func @kernel(%arg0: i32, %arg1: i32, %arg2: memref<2x8xi32, #tpu.memory_space<smem>>, %arg3: memref<512x128xf32, #tpu.memory_space<any>>, %arg4: memref<8x128xf32, #tpu.memory_space<vmem>>, %arg5: memref<1x8x128xf32, #tpu.memory_space<vmem>>, %arg6: memref<8x128xf32, #tpu.memory_space<vmem>>, %arg7: memref<1x!tpu.dma_semaphore, #tpu.memory_space<semaphore_mem>>) attributes {dimension_semantics = [#tpu.dimension_semantics<parallel>, #tpu.dimension_semantics<parallel>], iteration_bounds = array<i64: 1, 2>, scalar_prefetch = 1 : i64, scratch_operands = 2 : i64, tpu.core_type = #tpu.core_type<tc>, window_params = [{}, {transform_indices = @transform_1, window_bounds = array<i64: 8, 128>}, {transform_indices = @transform_2, window_bounds = array<i64: 1, 8, 128>}]} {
    %c8_i32 = arith.constant 8 : i32
    %0 = arith.muli %arg0, %c8_i32 : i32
    %c0_i32 = arith.constant 0 : i32
    %c8_i32_0 = arith.constant 8 : i32
    %1 = arith.addi %c0_i32, %c8_i32_0 : i32
    %c1_i32 = arith.constant 1 : i32
    scf.for %arg8 = %c0_i32 to %1 step %c1_i32  : i32 {
      %c1_i32_12 = arith.constant 1 : i32
      %9 = arith.muli %arg8, %c1_i32_12 : i32
      %c0_i32_13 = arith.constant 0 : i32
      %10 = arith.addi %c0_i32_13, %9 : i32
      %11 = arith.addi %0, %10 : i32
      %12 = arith.index_cast %arg1 : i32 to index
      %13 = arith.index_cast %11 : i32 to index
      %14 = memref.load %arg2[%12, %13] : memref<2x8xi32, #tpu.memory_space<smem>>
      %c0_i32_14 = arith.constant 0 : i32
      %c0_i32_15 = arith.constant 0 : i32
      %15 = tpu.memref_slice %arg3[%14, %c0_i32_15] : memref<512x128xf32, #tpu.memory_space<any>> -> memref<1x128xf32, #tpu.memory_space<any>>
      %c0_i32_16 = arith.constant 0 : i32
      %16 = tpu.memref_slice %arg6[%10, %c0_i32_16] : memref<8x128xf32, #tpu.memory_space<vmem>> -> memref<1x128xf32, #tpu.memory_space<vmem>>
      %17 = tpu.memref_slice %arg7[%c0_i32_14] : memref<1x!tpu.dma_semaphore, #tpu.memory_space<semaphore_mem>> -> memref<1x!tpu.dma_semaphore, #tpu.memory_space<semaphore_mem>>
      %18 = tpu.memref_squeeze %17 : memref<1x!tpu.dma_semaphore, #tpu.memory_space<semaphore_mem>> -> memref<!tpu.dma_semaphore, #tpu.memory_space<semaphore_mem>>
      tpu.enqueue_dma source(%15 : memref<1x128xf32, #tpu.memory_space<any>>) target(%16 : memref<1x128xf32, #tpu.memory_space<vmem>>) target_semaphore(%18 : memref<!tpu.dma_semaphore, #tpu.memory_space<semaphore_mem>>)
    }
    %c8_i32_1 = arith.constant 8 : i32
    %c0_i32_2 = arith.constant 0 : i32
    %c8_i32_3 = arith.constant 8 : i32
    %2 = arith.addi %c0_i32_2, %c8_i32_3 : i32
    %c1_i32_4 = arith.constant 1 : i32
    scf.for %arg8 = %c0_i32_2 to %2 step %c1_i32_4  : i32 {
      %c1_i32_12 = arith.constant 1 : i32
      %9 = arith.muli %arg8, %c1_i32_12 : i32
      %c0_i32_13 = arith.constant 0 : i32
      %10 = arith.addi %c0_i32_13, %9 : i32
      %c0_i32_14 = arith.constant 0 : i32
      %c0_i32_15 = arith.constant 0 : i32
      %c0_i32_16 = arith.constant 0 : i32
      %11 = tpu.memref_slice %arg3[%c0_i32_15, %c0_i32_16] : memref<512x128xf32, #tpu.memory_space<any>> -> memref<1x128xf32, #tpu.memory_space<any>>
      %c0_i32_17 = arith.constant 0 : i32
      %12 = tpu.memref_slice %arg6[%10, %c0_i32_17] : memref<8x128xf32, #tpu.memory_space<vmem>> -> memref<1x128xf32, #tpu.memory_space<vmem>>
      %13 = tpu.memref_slice %arg7[%c0_i32_14] : memref<1x!tpu.dma_semaphore, #tpu.memory_space<semaphore_mem>> -> memref<1x!tpu.dma_semaphore, #tpu.memory_space<semaphore_mem>>
      %14 = tpu.memref_squeeze %13 : memref<1x!tpu.dma_semaphore, #tpu.memory_space<semaphore_mem>> -> memref<!tpu.dma_semaphore, #tpu.memory_space<semaphore_mem>>
      tpu.wait_dma2 semaphore(%14 : memref<!tpu.dma_semaphore, #tpu.memory_space<semaphore_mem>>) src(%11 : memref<1x128xf32, #tpu.memory_space<any>>) dst(%12 : memref<1x128xf32, #tpu.memory_space<vmem>>)
    }
    %c8_i32_5 = arith.constant 8 : i32
    %c0 = arith.constant 0 : index
    %c0_6 = arith.constant 0 : index
    %3 = vector.load %arg6[%c0, %c0_6] : memref<8x128xf32, #tpu.memory_space<vmem>>, vector<8x128xf32>
    %c0_7 = arith.constant 0 : index
    %c0_8 = arith.constant 0 : index
    %4 = vector.load %arg4[%c0_7, %c0_8] : memref<8x128xf32, #tpu.memory_space<vmem>>, vector<8x128xf32>
    %5 = arith.addf %3, %4 : vector<8x128xf32>
    %c0_9 = arith.constant 0 : index
    %c0_10 = arith.constant 0 : index
    %c0_11 = arith.constant 0 : index
    %6 = vector.load %arg5[%c0_9, %c0_10, %c0_11] : memref<1x8x128xf32, #tpu.memory_space<vmem>>, vector<1x8x128xf32>
    %7 = vector.shape_cast %6 : vector<1x8x128xf32> to vector<8x128xf32>
    %8 = vector.shape_cast %5 : vector<8x128xf32> to vector<1x8x128xf32>
    tpu.vector_store %arg5[%c0_9, %c0_10, %c0_11], %8 {strides = array<i32>} : memref<1x8x128xf32, #tpu.memory_space<vmem>>, vector<1x8x128xf32>,
    return
  }
  func.func @transform_1(%arg0: i32, %arg1: i32, %arg2: memref<2x8xi32, #tpu.memory_space<smem>>) -> (i32, i32) {
    %c0_i32 = arith.constant 0 : i32
    %c0_i32_0 = arith.constant 0 : i32
    return %arg0, %c0_i32 : i32, i32
  }
  func.func @transform_2(%arg0: i32, %arg1: i32, %arg2: memref<2x8xi32, #tpu.memory_space<smem>>) -> (i32, i32, i32) {
    %c0_i32 = arith.constant 0 : i32
    %c0_i32_0 = arith.constant 0 : i32
    return %arg1, %arg0, %c0_i32 : i32, i32, i32
  }
}

</mosaic_0001>

<llo_original>
// kernel: tpu_custom_call.1
$region0: #{tpu_custom_call.1}
  #allocation0 [shape = 'u32[]', space=smem, size = 0x4, offset = 0x4, fixed_abs, tag = 'smem constant byte address 0x4 - core index']
  #allocation1 [shape = 'u32[144,128]{1,0:T(1,128)}', space=vmem, size = 0x12000, scoped, tag = 'internal scratch']
  #allocation2 [shape = 'f32[8,128]{1,0:T(8,128)}', space=vmem, size = 0x1000, scoped, tag = 'scratch operand']
  #allocation3 [shape = 's32[1]{0}', space=sflag, size = 0x4, scoped, tag = 'scratch operand']
  #allocation4 [shape = 's32[1]{0}', space=sflag, size = 0x4, scoped, tag = 'scoped memory for tpu_custom_call.1']
  #allocation5 [shape = 'u8[1024]{0}', space=smem, size = 0x400, scoped, tag = 'prefetched SMEM operand 0']
  #allocation10 [shape = 's32[]', space=sflag, size = 0x4, offset = 0, fixed_abs, tag = 'sflag constant byte address 0x0 - dummy sync flag']
  #allocation11 [shape = 's32[]', space=sflag, size = 0x4, offset = 0, fixed_abs, tag = 'sflag constant byte address 0x0 - dummy sync flag']
  #allocation12 [shape = 'u32[]', space=smem, size = 0x4, offset = 0x44, fixed_abs, tag = 'smem constant byte address 0x44 - assertion arg 0']
  #allocation13 [shape = 'u32[]', space=smem, size = 0x4, offset = 0x48, fixed_abs, tag = 'smem constant byte address 0x48 - assertion arg 1']
  %s0 = inlined_call_operand.hbm [shape: s32[2,8], index: 0, kind: input, shape index: {}]
  %s1 = inlined_call_operand.hbm [shape: f32[512,128], index: 1, kind: input, shape index: {}]
  %s2 = inlined_call_operand.hbm [shape: f32[64,128], index: 2, kind: input, shape index: {}]
  %s3 = inlined_call_operand.hbm [shape: f32[2,8,128], index: 3, kind: output, shape index: {}]
  %s4 = sld [smem:[#allocation0]]
  $region59: #{tpu_custom_call.1} parent=0
    _
  %s6 = ssub.s32 1, %s4
  %s7 = scalar_select 0, %s6, %s4
  %9 = dma.hbm_to_smem %s0, 32, [#allocation5], [#allocation4]
  %10 = dma.done [#allocation4], 32
  %11 = sfence
  $region1: #{tpu_custom_call.1} parent=0
    #allocation6 [shape = 'u8[4096]{0}', space=vmem, size = 0x1000, scoped, tag = 'input window, operand 2, single buffered']
    #allocation7 [shape = 's32[2]{0}', space=sflag, size = 0x8, scoped, tag = 'scoped memory for tpu_custom_call.1']
    #allocation8 [shape = 's32[2]{0}', space=sflag, size = 0x8, scoped, tag = 'scoped memory for tpu_custom_call.1']
    #allocation9 [shape = 'u8[8192]{0}', space=vmem, size = 0x2000, scoped, tag = 'output window, operand 0']
    %12 = vsyncpa [#allocation7], 0
    %13 = vsyncpa [#allocation8], 0
    %s14 = scalar_lea.sflag [#allocation8], 1
    %15 = vsyncpa %s14, 0
    loop: start=0, step=1, limit=4
    $region2: #{tpu_custom_call.1} parent=1 // loop_pre_header
      _
    $region3: #{tpu_custom_call.1} parent=1 // loop_header
      %s17 = sphi 0, %s21
      %p18 = scmp.ge.s32.totalorder %s17, 4
      %s24 = sphi 0, %s36
      %s25 = sphi 0, %s32
      %s26 = sphi 0, %s24
      %s27 = sphi 0, %s25
      %s28 = sphi 0, %s26
      %s29 = sphi 0, %s27
      %s39 = sphi 0, %s41
      %s42 = sphi 0, %s39
      %s43 = sphi 0, %s42
      %s59 = sphi 0, %s43
      %s67 = sphi 0, %s69
      %s70 = sphi 0, %s67
      %s71 = sphi 0, %s70
      %s87 = sphi 0, %s71
    $region4: #{tpu_custom_call.1} parent=1 // loop_header_branch
      %20 = sbr.rel (%p18) target = $region8
    $region5: #{tpu_custom_call.1} parent=1 // loop_body
      %s22 = ssub.s32 %s17, 1
      %s23 = ssub.s32 %s17, 2
      %s30 = sadd.s32 1, %s25
      %p31 = scmp.ge.s32.totalorder %s30, 2
      %s32 = scalar_select %p31, 0, %s30
      %s33 = sadd.s32 1, %s24
      %s34 = scalar_select %p31, %s33, %s24
      %p35 = scmp.ge.s32.totalorder %s34, 1
      %s36 = scalar_select %p35, 0, %s34
      %s37 = ssub.s32 %s24, %s36
      %p38 = scmp.eq.s32.totalorder %s37, 0
      %s40 = sadd.s32 %s39, 1
      %s41 = scalar_select %p38, %s39, %s40
      %p44 = pneg %p38
      %p45 = scmp.eq.s32.totalorder %s17, 1
      %p46 = por %p44, %p45
      %p47 = scmp.ne.s32.totalorder %s39, %s42
      %p48 = scmp.eq.s32.totalorder %s17, 0
      %p49 = por %p47, %p48
      %p50 = scmp.ne.s32.totalorder %s39, %s42
      %p51 = scmp.eq.s32.totalorder %s22, 1
      %p52 = por %p50, %p51
      %p53 = scmp.ne.s32.totalorder %s42, %s43
      %p54 = scmp.eq.s32.totalorder %s22, 0
      %p55 = por %p53, %p54
      %p56 = scmp.ne.s32.totalorder %s42, %s43
      %p57 = scmp.eq.s32.totalorder %s23, 1
      %p58 = por %p56, %p57
      %p60 = scmp.ne.s32.totalorder %s43, %s59
      %p61 = scmp.eq.s32.totalorder %s23, 0
      %p62 = por %p60, %p61
      %s63 = ssub.s32 %s25, %s32
      %s64 = ssub.s32 %s24, %s36
      %s65 = sor.u32 %s63, %s64
      %p66 = scmp.eq.s32.totalorder %s65, 0
      %s68 = sadd.s32 %s67, 1
      %s69 = scalar_select %p66, %s67, %s68
      %p72 = pneg %p66
      %p73 = scmp.eq.s32.totalorder %s17, 1
      %p74 = por %p72, %p73
      %p75 = scmp.ne.s32.totalorder %s67, %s70
      %p76 = scmp.eq.s32.totalorder %s17, 0
      %p77 = por %p75, %p76
      %p78 = scmp.ne.s32.totalorder %s67, %s70
      %p79 = scmp.eq.s32.totalorder %s22, 1
      %p80 = por %p78, %p79
      %p81 = scmp.ne.s32.totalorder %s70, %s71
      %p82 = scmp.eq.s32.totalorder %s22, 0
      %p83 = por %p81, %p82
      %p84 = scmp.ne.s32.totalorder %s70, %s71
      %p85 = scmp.eq.s32.totalorder %s23, 1
      %p86 = por %p84, %p85
      %p88 = scmp.ne.s32.totalorder %s71, %s87
      %p89 = scmp.eq.s32.totalorder %s23, 0
      %p90 = por %p88, %p89
      %p91 = scmp.le.s32.totalorder 1, %s17
      %p92 = scmp.lt.s32.totalorder %s17, 3
      %p93 = pnand %p91, %p92
      %p94 = pneg %p93
      // Predicated region
      $region9: #{tpu_custom_call.1} parent=5 // pred_check
        _
      $region10: #{tpu_custom_call.1} parent=5 // pred_check_branch
        %96 = sbr.rel (%p93) target = $region12
      $region11: #{tpu_custom_call.1} parent=5 // pred_region
        %s97 = ssub.s32 %s17, 1
        // Predicated region
        $region13: #{tpu_custom_call.1} parent=11 // pred_check
          %p98 = pneg %p55
        $region14: #{tpu_custom_call.1} parent=11 // pred_check_branch
          %100 = sbr.rel (%p98) target = $region16
        $region15: #{tpu_custom_call.1} parent=11 // pred_region
          %s102 = ssub.s32 128, 128
          %103 = vsyncadd [#allocation7], %s102
          %s104 = smul.addr %s26, 128
          %s105 = scalar_lea.hbm %s2, %s104
          %s107 = sshll.u32 [#allocation6], 4
          %s108 = int_to_ptr.vmem [resolvable:$true] %s107
          %110 = dma.hbm_to_vmem [thread:$0]  %s105, 128, %s108, [#allocation7]
        $region16: #{tpu_custom_call.1} parent=11 // pred_fallthru
          _
      $region12: #{tpu_custom_call.1} parent=5 // pred_fallthru
        _
      %p111 = scmp.lt.s32.totalorder %s17, 2
      // Predicated region
      $region17: #{tpu_custom_call.1} parent=5 // pred_check
        %p112 = pneg %p111
      $region18: #{tpu_custom_call.1} parent=5 // pred_check_branch
        %114 = sbr.rel (%p112) target = $region20
      $region19: #{tpu_custom_call.1} parent=5 // pred_region
        _
      $region20: #{tpu_custom_call.1} parent=5 // pred_fallthru
        _
      %p115 = scmp.le.s32.totalorder 1, %s17
      %p116 = scmp.lt.s32.totalorder %s17, 3
      %p117 = pnand %p115, %p116
      %p118 = pneg %p117
      // Predicated region
      $region21: #{tpu_custom_call.1} parent=5 // pred_check
        _
      $region22: #{tpu_custom_call.1} parent=5 // pred_check_branch
        %120 = sbr.rel (%p117) target = $region24
      $region23: #{tpu_custom_call.1} parent=5 // pred_region
        %s121 = ssub.s32 %s17, 1
        // Predicated region
        $region25: #{tpu_custom_call.1} parent=23 // pred_check
          %p122 = pneg %p55
        $region26: #{tpu_custom_call.1} parent=23 // pred_check_branch
          %124 = sbr.rel (%p122) target = $region28
        $region27: #{tpu_custom_call.1} parent=23 // pred_region
          %125 = dma.done [#allocation7], 128
        $region28: #{tpu_custom_call.1} parent=23 // pred_fallthru
          _
        %p126 = pneg %p55
        %p127 = pneg %p52
        %p128 = pneg %p83
        %p129 = pneg %p80
        %s130 = sand.u32 %s70, 1
        %s131 = scalar_lea.sflag [#allocation8], %s130
        %s132 = sand.u32 %s70, 1
        %s133 = smul.addr %s132, 8
        %s134 = scalar_lea.vmem [#allocation9], %s133
        %s135 = smul.u32 %s26, 8
        loop: start=0, step=1, limit=8
        $region29: #{tpu_custom_call.1} parent=23 // loop_pre_header
          _
        $region30: #{tpu_custom_call.1} parent=23 // loop_header
          %s137 = sphi 0, %s141
          %p138 = scmp.ge.s32.totalorder %s137, 8
        $region31: #{tpu_custom_call.1} parent=23 // loop_header_branch
          %140 = sbr.rel (%p138) target = $region35
        $region32: #{tpu_custom_call.1} parent=23 // loop_body
          %s142 = sadd.s32 %s135, %s137
          %s143 = sshra.s32 %s142, 7
          %s144 = sand.u32 %s142, 127
          %s145 = sadd.s32 %s143, %s27
          %s146 = smul.u32 %s145, 128
          %s147 = sshra.s32 %s142, 7
          %s148 = sand.u32 %s142, 127
          %s149 = sadd.s32 %s146, %s148
          %s150 = sld [smem:[#allocation5 + %s149]]
          %s151 = smul.addr %s150, 16
          %s152 = scalar_lea.hbm %s1, %s151
          %s153 = scalar_lea.vmem [#allocation2], %s137
          // Predicated region
          $region36: #{tpu_custom_call.1} parent=32 // pred_check
            _
          $region37: #{tpu_custom_call.1} parent=32 // pred_check_branch
            %155 = sbr.rel target = $region39
          $region38: #{tpu_custom_call.1} parent=32 // pred_region
            %156 = sst [smem:[#allocation12]] [#allocation11]
            %157 = sst [smem:[#allocation13]] [#allocation10]
          $region39: #{tpu_custom_call.1} parent=32 // pred_fallthru
            _
          %159 = shalt.err (0)
          %s161 = sshll.u32 %s153, 4
          %s162 = int_to_ptr.vmem [resolvable:$true] %s161
          %164 = dma.hbm_to_vmem [thread:$0]  %s152, 16, %s162, [#allocation3]
        $region33: #{tpu_custom_call.1} parent=23 // loop_footer
          %s141 = sadd.s32 1, %s137
        $region34: #{tpu_custom_call.1} parent=23 // loop_footer_branch
          %136 = sbr.rel target = $region30
        $region35: #{tpu_custom_call.1} parent=23 // loop_exit
          _
        loop: start=0, step=1, limit=8
        $region40: #{tpu_custom_call.1} parent=23 // loop_pre_header
          _
        $region41: #{tpu_custom_call.1} parent=23 // loop_header
          %s166 = sphi 0, %s170
          %p167 = scmp.ge.s32.totalorder %s166, 8
        $region42: #{tpu_custom_call.1} parent=23 // loop_header_branch
          %169 = sbr.rel (%p167) target = $region46
        $region43: #{tpu_custom_call.1} parent=23 // loop_body
          %s171 = smul.u32 1, 1
          %s172 = sshll.u32 %s171, 4
          %173 = dma.done [#allocation3], %s172
        $region44: #{tpu_custom_call.1} parent=23 // loop_footer
          %s170 = sadd.s32 1, %s166
        $region45: #{tpu_custom_call.1} parent=23 // loop_footer_branch
          %165 = sbr.rel target = $region41
        $region46: #{tpu_custom_call.1} parent=23 // loop_exit
          _
        %v174 = vld [vmem:[#allocation2] sm:$0xff]
        %v175 = vld [vmem:[#allocation6] sm:$0xff]
        %v176 = vadd.f32 %v174, %v175
        %177 = vst [vmem:[%s134] sm:$0xff] %v176
        %s178 = sand.u32 %s70, 1
        %s179 = scalar_lea.sflag [#allocation8], %s178
        %s180 = sand.u32 %s70, 1
        %s181 = smul.addr %s180, 8
        %s182 = scalar_lea.vmem [#allocation9], %s181
        // Predicated region
        $region47: #{tpu_custom_call.1} parent=23 // pred_check
          %p183 = pneg %p80
        $region48: #{tpu_custom_call.1} parent=23 // pred_check_branch
          %185 = sbr.rel (%p183) target = $region50
        $region49: #{tpu_custom_call.1} parent=23 // pred_region
          %s187 = ssub.s32 128, 128
          %188 = vsyncadd %s179, %s187
          %s189 = sadd.s32 %s26, %s27
          %s190 = smul.addr %s189, 128
          %s191 = scalar_lea.hbm %s3, %s190
          %s193 = sshll.u32 %s182, 4
          %s194 = int_to_ptr.vmem [resolvable:$true] %s193
          %196 = dma.vmem_to_hbm [thread:$0]  %s194, 128, %s191, %s179
        $region50: #{tpu_custom_call.1} parent=23 // pred_fallthru
          _
      $region24: #{tpu_custom_call.1} parent=5 // pred_fallthru
        _
      %p197 = scmp.le.s32.totalorder 2, %s17
      // Predicated region
      $region51: #{tpu_custom_call.1} parent=5 // pred_check
        %p198 = pneg %p197
      $region52: #{tpu_custom_call.1} parent=5 // pred_check_branch
        %200 = sbr.rel (%p198) target = $region54
      $region53: #{tpu_custom_call.1} parent=5 // pred_region
        %s201 = ssub.s32 %s17, 2
        // Predicated region
        $region55: #{tpu_custom_call.1} parent=53 // pred_check
          %p202 = pneg %p86
        $region56: #{tpu_custom_call.1} parent=53 // pred_check_branch
          %204 = sbr.rel (%p202) target = $region58
        $region57: #{tpu_custom_call.1} parent=53 // pred_region
          %s205 = sand.u32 %s71, 1
          %s206 = scalar_lea.sflag [#allocation8], %s205
          %s207 = sand.u32 %s71, 1
          %s208 = smul.addr %s207, 8
          %s209 = scalar_lea.vmem [#allocation9], %s208
          %210 = dma.done %s206, 128
        $region58: #{tpu_custom_call.1} parent=53 // pred_fallthru
          _
      $region54: #{tpu_custom_call.1} parent=5 // pred_fallthru
        _
    $region6: #{tpu_custom_call.1} parent=1 // loop_footer
      %s21 = sadd.s32 1, %s17
    $region7: #{tpu_custom_call.1} parent=1 // loop_footer_branch
      %16 = sbr.rel target = $region3
    $region8: #{tpu_custom_call.1} parent=1 // loop_exit
      _
    %211 = vsyncpa [#allocation7], 1
    %s212 = scalar_lea.sflag [#allocation7], 1
    %213 = vsyncpa %s212, 1
    %214 = vsyncpa [#allocation8], 1
    %s215 = scalar_lea.sflag [#allocation8], 1
    %216 = vsyncpa %s215, 1
  %217 = vsyncmov [#allocation3]
  %s218 = vpop.sfrf %217
  %p219 = scmp.eq.s32.totalorder %s218, 0
  %p220 = pneg %p219
  %222 = shalt.err (%p220)

</llo_original>
